<compile_context>
chip_gen: v6e
topology: v6e:2x2x1
jax: 0.10.0
libtpu: 0.0.40
codegen_flags: <defaults>
</compile_context>

<pallas_src>
import functools

import jax
import jax.numpy as jnp
from jax.experimental import pallas as pl
from jax.experimental.pallas import tpu as pltpu


def _pos_enc_kernel(x_ref, c_ref, out_ref, *, g):
    """One (tR, L) output block of sin(position * inv_freq + phase_offset).

    x_ref:   (tR, g)   f32  g scalar positions per folded output row
    c_ref:   (g+1, L)  f32  rows 0..g-1: lane-masked inverse-frequency rows (row j is nonzero
                            only in lanes [j*D, (j+1)*D)); row g: phase offset per lane
                            (0.0 for sin lanes, pi/2 for cos lanes)
    out_ref: (tR, L)
    """
    # g VPU madds + one EUP sin per output element; all lanes of every vreg are live.
    phase = x_ref[:, 0:1] * c_ref[0:1, :] + c_ref[g:g + 1, :]
    for j in range(1, g):  # static tiny loop; empty when g == 1
        phase = phase + x_ref[:, j:j + 1] * c_ref[j:j + 1, :]
    # NOTE(v7x): if jnp.sin lowers to a VALU range-reduction polynomial rather than a native
    # EUP op, v7x becomes compute-bound here; check the bundle dump before chasing write bytes.
    out_ref[...] = jnp.sin(phase).astype(out_ref.dtype)


def _choose_fold(rows, D):
    """Fold g consecutive rows onto the lane axis so the output block is >=128 lanes wide."""
    if D < 128 and 128 % D == 0:
        g = 128 // D
        if rows % g == 0:
            return g
    return 1  # d_model >= 128 is already lane-dense; odd widths fall back to the plain layout


def _choose_row_tile(rows_k, lane_width, out_itemsize):
    """Rows per grid step; targets ~4 MiB of output per block (amortizes ~0.35 us/step)."""
    target = max(8, (4 << 20) // (lane_width * out_itemsize))
    if rows_k <= target:
        # Small problem: still cut into >=2 blocks when possible so both v7x TensorCores get
        # work from the "parallel" grid axis (negligible cost on single-TC v5e/v6e).
        if rows_k >= 16:
            return max(8, (((rows_k + 1) // 2) // 8) * 8)
        return rows_k
    return (target // 8) * 8


def positional_encoding(x, d_model, max_inv_freq=10000.0, out_dtype=jnp.float32):
    """x: (B, S, 1) scalar positions -> (B, S, d_model) positional encoding.

    Matches PositionalEncoding.forward:
        out[..., 2i]   = sin(x * w_i),   out[..., 2i+1] = cos(x * w_i),
        w_i = exp(-2i * log(max_inv_freq) / d_model).

    If positions are the standard 0..S-1 ramp shared across the batch, call with B=1 and
    broadcast the result outside -- the output does not depend on the batch index then.
    """
    assert x.ndim == 3 and x.shape[-1] == 1, "expected (batch, seq, 1)"
    assert d_model % 2 == 0, "d_model must be even (the PyTorch module writes lane i+1)"
    B, S, _ = x.shape
    D = d_model
    rows = B * S

    # ---- host-side constants (tiny, D-only; DMA'd once and resident across all steps) -------
    lane = jnp.arange(D, dtype=jnp.int32)
    i_pair = (lane - (lane % 2)).astype(jnp.float32)                  # 0,0,2,2,4,4,...
    inv_freq = jnp.exp(i_pair * (-(jnp.log(jnp.float32(max_inv_freq)) / jnp.float32(D))))
    offset = jnp.where(lane % 2 == 0, 0.0, jnp.pi / 2.0).astype(jnp.float32)

    # ---- lane-dense folding for small d_model -------------------------------------------------
    g = _choose_fold(rows, D)            # fold g consecutive rows onto the lane axis
    L = g * D                            # lane width of the kernel's blocks (>=128 when folded)
    rows_k = rows // g                   # kernel-view row count

    if g == 1:
        consts = jnp.stack([inv_freq, offset], axis=0)                # (2, D)
    else:
        div_rows = jnp.zeros((g, L), jnp.float32)
        for j in range(g):                                            # tiny host-side setup
            div_rows = div_rows.at[j, j * D:(j + 1) * D].set(inv_freq)
        consts = jnp.concatenate([div_rows, jnp.tile(offset, g)[None, :]], axis=0)  # (g+1, L)

    x2d = x.astype(jnp.float32).reshape(rows_k, g)                    # free row-major reshape

    out_itemsize = jnp.dtype(out_dtype).itemsize
    tR = _choose_row_tile(rows_k, L, out_itemsize)
    grid = (pl.cdiv(rows_k, tR),)

    cost = pl.CostEstimate(
        flops=2 * rows * D * g,
        transcendentals=rows * D,
        bytes_accessed=rows * 4 + int(consts.size) * 4 + rows * D * out_itemsize,
    )

    out2d = pl.pallas_call(
        functools.partial(_pos_enc_kernel, g=g),
        out_shape=jax.ShapeDtypeStruct((rows_k, L), out_dtype),
        grid_spec=pltpu.PrefetchScalarGridSpec(
            num_scalar_prefetch=0,
            grid=grid,
            in_specs=[
                pl.BlockSpec((tR, g), lambda r: (r, 0)),              # positions tile
                pl.BlockSpec((g + 1, L), lambda r: (0, 0)),           # fused constants (resident)
            ],
            out_specs=pl.BlockSpec((tR, L), lambda r: (r, 0)),
        ),
        compiler_params=pltpu.CompilerParams(
            dimension_semantics=("parallel",),                        # megacore-shardable axis
            vmem_limit_bytes=32 * 1024 * 1024,
        ),
        cost_estimate=cost,
    )(x2d, consts)

    return out2d.reshape(B, S, D)                                     # free row-major reshape


def _reference(x, d_model, max_inv_freq=10000.0):
    """Pure-JAX mirror of PositionalEncoding.forward."""
    B, S, _ = x.shape
    xs = x[..., 0].astype(jnp.float32)                                # (B, S)
    i = jnp.arange(0, d_model, 2, dtype=jnp.float32)
    div = jnp.exp(i * -(jnp.log(jnp.float32(max_inv_freq)) / d_model))
    ang = xs[..., None] * div                                         # (B, S, D/2)
    return jnp.stack([jnp.sin(ang), jnp.cos(ang)], axis=-1).reshape(B, S, d_model)


if __name__ == "__main__":
    key = jax.random.PRNGKey(0)
    batch, seq = 2, 8
    x = jax.random.uniform(key, (batch, seq, 1), jnp.float32, minval=0.0, maxval=float(seq))

    # d_model = 32 exercises the lane-dense fold path (g = 4).
    out32 = jax.block_until_ready(positional_encoding(x, 32))
    ref32 = _reference(x, 32)
    assert out32.shape == (batch, seq, 32)
    assert jnp.allclose(out32, ref32, atol=1e-5, rtol=1e-5), "d_model=32 mismatch vs reference"

    # d_model = 128 exercises the plain lane-dense path (g = 1).
    out128 = jax.block_until_ready(positional_encoding(x, 128))
    ref128 = _reference(x, 128)
    assert out128.shape == (batch, seq, 128)
    assert jnp.allclose(out128, ref128, atol=1e-5, rtol=1e-5), "d_model=128 mismatch vs reference"

    # bf16 output (for HBM-write-bound deployments on v5e/v6e): same kernel, cast at the store.
    out_bf16 = jax.block_until_ready(positional_encoding(x, 32, out_dtype=jnp.bfloat16))
    assert jnp.allclose(out_bf16.astype(jnp.float32), ref32, atol=2e-2, rtol=2e-2), "bf16 mismatch"

    print("KERNEL_OK")
</pallas_src>

<mosaic_0001>
module attributes {stable_mosaic.version = 11 : i64} {
  func.func @_pos_enc_kernel(%arg0: i32, %arg1: memref<4x4xf32, #tpu.memory_space<vmem>>, %arg2: memref<5x128xf32, #tpu.memory_space<vmem>>, %arg3: memref<4x128xf32, #tpu.memory_space<vmem>>) attributes {dimension_semantics = [#tpu.dimension_semantics<parallel>], iteration_bounds = array<i64: 1>, scalar_prefetch = 0 : i64, scratch_operands = 0 : i64, tpu.core_type = #tpu.core_type<tc>, window_params = [{transform_indices = @transform_0, window_bounds = array<i64: 4, 4>}, {pipeline_mode = #tpu.pipeline_mode<synchronous>, transform_indices = @transform_1, window_bounds = array<i64: 5, 128>}, {transform_indices = @transform_2, window_bounds = array<i64: 4, 128>}]} {
    %c0 = arith.constant 0 : index
    %c0_0 = arith.constant 0 : index
    %0 = vector.load %arg1[%c0, %c0_0] : memref<4x4xf32, #tpu.memory_space<vmem>>, vector<4x1xf32>
    %c0_1 = arith.constant 0 : index
    %c0_2 = arith.constant 0 : index
    %1 = vector.load %arg2[%c0_1, %c0_2] : memref<5x128xf32, #tpu.memory_space<vmem>>, vector<1x128xf32>
    %2 = vector.broadcast %0 : vector<4x1xf32> to vector<4x128xf32>
    %3 = vector.broadcast %1 : vector<1x128xf32> to vector<4x128xf32>
    %4 = arith.mulf %2, %3 : vector<4x128xf32>
    %c4 = arith.constant 4 : index
    %c0_3 = arith.constant 0 : index
    %5 = vector.load %arg2[%c4, %c0_3] : memref<5x128xf32, #tpu.memory_space<vmem>>, vector<1x128xf32>
    %6 = vector.broadcast %5 : vector<1x128xf32> to vector<4x128xf32>
    %7 = arith.addf %4, %6 : vector<4x128xf32>
    %c0_4 = arith.constant 0 : index
    %c1 = arith.constant 1 : index
    %8 = vector.load %arg1[%c0_4, %c1] : memref<4x4xf32, #tpu.memory_space<vmem>>, vector<4x1xf32>
    %c1_5 = arith.constant 1 : index
    %c0_6 = arith.constant 0 : index
    %9 = vector.load %arg2[%c1_5, %c0_6] : memref<5x128xf32, #tpu.memory_space<vmem>>, vector<1x128xf32>
    %10 = vector.broadcast %8 : vector<4x1xf32> to vector<4x128xf32>
    %11 = vector.broadcast %9 : vector<1x128xf32> to vector<4x128xf32>
    %12 = arith.mulf %10, %11 : vector<4x128xf32>
    %13 = arith.addf %7, %12 : vector<4x128xf32>
    %c0_7 = arith.constant 0 : index
    %c2 = arith.constant 2 : index
    %14 = vector.load %arg1[%c0_7, %c2] : memref<4x4xf32, #tpu.memory_space<vmem>>, vector<4x1xf32>
    %c2_8 = arith.constant 2 : index
    %c0_9 = arith.constant 0 : index
    %15 = vector.load %arg2[%c2_8, %c0_9] : memref<5x128xf32, #tpu.memory_space<vmem>>, vector<1x128xf32>
    %16 = vector.broadcast %14 : vector<4x1xf32> to vector<4x128xf32>
    %17 = vector.broadcast %15 : vector<1x128xf32> to vector<4x128xf32>
    %18 = arith.mulf %16, %17 : vector<4x128xf32>
    %19 = arith.addf %13, %18 : vector<4x128xf32>
    %c0_10 = arith.constant 0 : index
    %c3 = arith.constant 3 : index
    %20 = vector.load %arg1[%c0_10, %c3] : memref<4x4xf32, #tpu.memory_space<vmem>>, vector<4x1xf32>
    %c3_11 = arith.constant 3 : index
    %c0_12 = arith.constant 0 : index
    %21 = vector.load %arg2[%c3_11, %c0_12] : memref<5x128xf32, #tpu.memory_space<vmem>>, vector<1x128xf32>
    %22 = vector.broadcast %20 : vector<4x1xf32> to vector<4x128xf32>
    %23 = vector.broadcast %21 : vector<1x128xf32> to vector<4x128xf32>
    %24 = arith.mulf %22, %23 : vector<4x128xf32>
    %25 = arith.addf %19, %24 : vector<4x128xf32>
    %26 = math.sin %25 : vector<4x128xf32>
    %c0_13 = arith.constant 0 : index
    %c0_14 = arith.constant 0 : index
    %27 = vector.load %arg3[%c0_13, %c0_14] : memref<4x128xf32, #tpu.memory_space<vmem>>, vector<4x128xf32>
    tpu.vector_store %arg3[%c0_13, %c0_14], %26 {strides = array<i32>} : memref<4x128xf32, #tpu.memory_space<vmem>>, vector<4x128xf32>,
    return
  }
  func.func @transform_0(%arg0: i32) -> (i32, i32) {
    %c0_i32 = arith.constant 0 : i32
    %c0_i32_0 = arith.constant 0 : i32
    return %arg0, %c0_i32 : i32, i32
  }
  func.func @transform_1(%arg0: i32) -> (i32, i32) {
    %c0_i32 = arith.constant 0 : i32
    %c0_i32_0 = arith.constant 0 : i32
    %c0_i32_1 = arith.constant 0 : i32
    return %c0_i32, %c0_i32_0 : i32, i32
  }
  func.func @transform_2(%arg0: i32) -> (i32, i32) {
    %c0_i32 = arith.constant 0 : i32
    %c0_i32_0 = arith.constant 0 : i32
    return %arg0, %c0_i32 : i32, i32
  }
}

</mosaic_0001>

<llo_original>
// kernel: tpu_custom_call.1
$region0: #{tpu_custom_call.1}
  #allocation0 [shape = 'u32[]', space=smem, size = 0x4, offset = 0x4, fixed_abs, tag = 'smem constant byte address 0x4 - core index']
  #allocation1 [shape = 'u32[144,128]{1,0:T(1,128)}', space=vmem, size = 0x12000, scoped, tag = 'internal scratch']
  %s0 = inlined_call_operand.hbm [shape: f32[4,4], index: 0, kind: input, shape index: {}]
  %s1 = inlined_call_operand.hbm [shape: f32[5,128], index: 1, kind: input, shape index: {}]
  %s2 = inlined_call_operand.hbm [shape: f32[4,128], index: 2, kind: output, shape index: {}]
  %s3 = sld [smem:[#allocation0]]
  $region26: #{tpu_custom_call.1} parent=0
    _
  %s5 = ssub.s32 1, %s3
  %s6 = scalar_select 0, %s5, %s3
  $region1: #{tpu_custom_call.1} parent=0
    #allocation2 [shape = 'u8[2048]{0}', space=vmem, size = 0x800, scoped, tag = 'input window, operand 0, single buffered']
    #allocation3 [shape = 's32[1]{0}', space=sflag, size = 0x4, scoped, tag = 'scoped memory for tpu_custom_call.1']
    #allocation4 [shape = 's32[1]{0}', space=sflag, size = 0x4, scoped, tag = 'scoped memory for tpu_custom_call.1']
    #allocation5 [shape = 'u8[4096]{0}', space=vmem, size = 0x1000, scoped, tag = 'input window, operand 1, single buffered']
    #allocation6 [shape = 's32[1]{0}', space=sflag, size = 0x4, scoped, tag = 'scoped memory for tpu_custom_call.1']
    #allocation7 [shape = 'u8[2048]{0}', space=vmem, size = 0x800, scoped, tag = 'output window, operand 0, single buffered']
    %7 = vsyncpa [#allocation3], 0
    %8 = vsyncpa [#allocation6], 0
    %9 = vsyncpa [#allocation4], 0
    // Predicated region
    $region2: #{tpu_custom_call.1} parent=1 // pred_check
      _
    $region3: #{tpu_custom_call.1} parent=1 // pred_check_branch
      %11 = sbr.rel (0) target = $region5
    $region4: #{tpu_custom_call.1} parent=1 // pred_region
      %s13 = ssub.s32 64, 64
      %14 = vsyncadd [#allocation3], %s13
      %s16 = sshll.u32 [#allocation2], 4
      %s17 = int_to_ptr.vmem [resolvable:$true] %s16
      %19 = dma.hbm_to_vmem [thread:$0]  %s0, 64, %s17, [#allocation3]
    $region5: #{tpu_custom_call.1} parent=1 // pred_fallthru
      _
    // Predicated region
    $region6: #{tpu_custom_call.1} parent=1 // pred_check
      _
    $region7: #{tpu_custom_call.1} parent=1 // pred_check_branch
      %21 = sbr.rel (0) target = $region9
    $region8: #{tpu_custom_call.1} parent=1 // pred_region
      %s23 = ssub.s32 128, 128
      %24 = vsyncadd [#allocation6], %s23
      %s26 = sshll.u32 [#allocation5], 4
      %s27 = int_to_ptr.vmem [resolvable:$true] %s26
      %29 = dma.hbm_to_vmem [thread:$0]  %s1, 128, %s27, [#allocation6]
    $region9: #{tpu_custom_call.1} parent=1 // pred_fallthru
      _
    // Predicated region
    $region10: #{tpu_custom_call.1} parent=1 // pred_check
      _
    $region11: #{tpu_custom_call.1} parent=1 // pred_check_branch
      %31 = sbr.rel (0) target = $region13
    $region12: #{tpu_custom_call.1} parent=1 // pred_region
      %32 = dma.done [#allocation3], 64
    $region13: #{tpu_custom_call.1} parent=1 // pred_fallthru
      _
    // Predicated region
    $region14: #{tpu_custom_call.1} parent=1 // pred_check
      _
    $region15: #{tpu_custom_call.1} parent=1 // pred_check_branch
      %34 = sbr.rel (0) target = $region17
    $region16: #{tpu_custom_call.1} parent=1 // pred_region
      %35 = dma.done [#allocation6], 128
    $region17: #{tpu_custom_call.1} parent=1 // pred_fallthru
      _
    %v36 = vld [vmem:[#allocation2] sm:$0xf]
    %v37 = vld [vmem:[#allocation5] sm:$0x1]
    %39 = vset.pattern.permute.xlu0 0
    %40 = vperm.xlu0 %39, %v36
    %v41 = vpop.permute.xlu0 %40
    %v43 = vlaneseq
    %v44 = vshrl.u32 %v43, 7
    %v45 = vsub.s32 0, %v44
    %v46 = vrot.slane %v37, %v45
    %v47 = vmul.f32 %v41, %v46
    %v48 = vld [vmem:[#allocation5 + $0x4] sm:$0x1]
    %v49 = vlaneseq
    %v50 = vshrl.u32 %v49, 7
    %v51 = vsub.s32 0, %v50
    %v52 = vrot.slane %v48, %v51
    %v53 = vadd.f32 %v47, %v52
    %v54 = vld [vmem:[#allocation5 + $0x1] sm:$0x1]
    %55 = vset.pattern.permute.xlu0 1
    %56 = vperm.xlu0 %55, %v36
    %v57 = vpop.permute.xlu0 %56
    %v59 = vlaneseq
    %v60 = vshrl.u32 %v59, 7
    %v61 = vsub.s32 0, %v60
    %v62 = vrot.slane %v54, %v61
    %v63 = vmul.f32 %v57, %v62
    %v64 = vadd.f32 %v53, %v63
    %v65 = vld [vmem:[#allocation5 + $0x2] sm:$0x1]
    %66 = vset.pattern.permute.xlu0 2
    %67 = vperm.xlu0 %66, %v36
    %v68 = vpop.permute.xlu0 %67
    %v70 = vlaneseq
    %v71 = vshrl.u32 %v70, 7
    %v72 = vsub.s32 0, %v71
    %v73 = vrot.slane %v65, %v72
    %v74 = vmul.f32 %v68, %v73
    %v75 = vadd.f32 %v64, %v74
    %v76 = vld [vmem:[#allocation5 + $0x3] sm:$0x1]
    %77 = vset.pattern.permute.xlu0 3
    %78 = vperm.xlu0 %77, %v36
    %v79 = vpop.permute.xlu0 %78
    %v81 = vlaneseq
    %v82 = vshrl.u32 %v81, 7
    %v83 = vsub.s32 0, %v82
    %v84 = vrot.slane %v76, %v83
    %v85 = vmul.f32 %v79, %v84
    %v86 = vadd.f32 %v75, %v85
    %v87 = vand.u32 2147483647, %v86
    %vm88 = vcmp.le.f32.partialorder %v87, 0.7853982
    %vm89 = vcmp.lt.s32.totalorder %v86, 0
    %v90 = vand.u32 %v86, 2139095040
    %v91 = vshrl.u32 %v90, 23
    %v92 = vsub.s32 %v91, 127
    %v93 = vand.u32 2147483647, %v86
    %v94 = vand.u32 %v93, 8388607
    %v95 = vor.u32 %v94, 8388608
    %v96 = vsub.s32 0, %v95
    %v97 = vadd.s32 %v92, 1
    %vm98 = vcmp.gt.s32.totalorder %v97, 0
    %v99 = vsel %vm98, %v97, 0
    %v100 = vshrl.u32 %v99, 5
    %v101 = vand.u32 %v99, 31
    %v102 = vsub.s32 32, %v101
    %v103 = vshrl.u32 683565275, %v102
    %v104 = vshll.u32 683565275, %v101
    %v105 = vshrl.u32 2475754826, %v102
    %v106 = vor.u32 %v104, %v105
    %v107 = vshll.u32 2475754826, %v101
    %v108 = vshrl.u32 2131351028, %v102
    %v109 = vor.u32 %v107, %v108
    %v110 = vshll.u32 2131351028, %v101
    %v111 = vshrl.u32 2102212464, %v102
    %v112 = vor.u32 %v110, %v111
    %v113 = vshll.u32 2102212464, %v101
    %v114 = vshrl.u32 920167782, %v102
    %v115 = vor.u32 %v113, %v114
    %v116 = vshll.u32 920167782, %v101
    %v117 = vshrl.u32 1326507024, %v102
    %v118 = vor.u32 %v116, %v117
    %vm119 = vcmp.lt.s32.totalorder %v100, 1
    %vm120 = vcmp.lt.s32.totalorder %v100, 2
    %vm121 = vcmp.lt.s32.totalorder %v100, 3
    %vm122 = vcmp.lt.s32.totalorder %v100, 4
    %v123 = vsel %vm119, %v103, %v106
    %v124 = vsel %vm122, %v112, 2102212464
    %v125 = vsel %vm121, %v109, %v124
    %v126 = vsel %vm120, %v123, %v125
    %v127 = vsel %vm119, %v106, %v109
    %v128 = vsel %vm122, %v115, 920167782
    %v129 = vsel %vm121, %v112, %v128
    %v130 = vsel %vm120, %v127, %v129
    %v131 = vsel %vm119, %v109, %v112
    %v132 = vsel %vm122, %v118, 1326507024
    %v133 = vsel %vm121, %v115, %v132
    %v134 = vsel %vm120, %v131, %v133
    %v135 = vshll.u32 %v95, 8
    %v136 = vmul.u32.u64.compose %v135, %v134
    %v137 = vextract.low.u32 %v136
    %v138 = vextract.high.u32 %v136
    %v139 = vmul.u32.u64.compose %v135, %v130
    %v140 = vextract.low.u32 %v139
    %v141 = vextract.high.u32 %v139
    %v142 = vmul.u32 %v135, %v126
    %v143 = vadd.s32 %v138, %v140
    %vm144 = vc.u32 %v138, %v140
    %v145 = vadd.s32 %v141, 1
    %v146 = vsel %vm144, %v145, %v141
    %v147 = vadd.s32 %v142, %v146
    %v148 = vadd.s32 %v147, 536870912
    %v149 = vshrl.u32 %v148, 30
    %v150 = vshll.u32 %v149, 30
    %v151 = vsub.s32 %v147, %v150
    %vm152 = vcmp.lt.s32.totalorder %v151, 0
    %v153 = vsub.s32 0, %v151
    %v154 = vsel %vm152, %v153, %v151
    %v155 = vclz %v154
    %v156 = vsub.s32 %v155, 2
    %vm157 = vcmp.gt.s32.totalorder 0, %v156
    %v158 = vsel %vm157, 0, %v156
    %v159 = vsub.s32 32, %v158
    %v160 = vshll.u32 %v151, %v158
    %v161 = vshrl.u32 %v143, %v159
    %v162 = vor.u32 %v160, %v161
    %v163 = vsub.s32 4294967266, %v158
    %v164 = vadd.s32 %v163, 127
    %v165 = vshll.u32 %v164, 23
    %v166 = vor.u32 4788187, %v165
    %v167 = vand.u32 2147483647, %v166
    %v169 = vcvt.s32.f32 %v162
    %v170 = vmul.f32 %v169, %v167
    %v171 = vxor.u32 %v170, 2147483648
    %v172 = vsel %vm89, %v171, %v170
    %v173 = vsub.s32 4, %v149
    %v174 = vsel %vm89, %v173, %v149
    %v175 = vsel %vm88, %v86, %v172
    %v176 = vsel %vm88, 0, %v174
    %v177 = vcosq.f32.pop %v175
    %v178 = vsinq.f32.pop %v175
    %vm179 = vweird.f32 %v86
    %v180 = vadd.s32 %v176, 3
    %v181 = vand.u32 %v180, 3
    %vm182 = vcmp.lt.s32.totalorder %v181, 2
    %vm183 = vcmp.eq.s32.totalorder %v181, 0
    %v184 = vxor.u32 %v178, 2147483648
    %v185 = vsel %vm183, %v177, %v184
    %vm186 = vcmp.eq.s32.totalorder %v181, 2
    %v187 = vxor.u32 %v177, 2147483648
    %v188 = vsel %vm186, %v187, %v178
    %v189 = vsel %vm182, %v185, %v188
    %v190 = vsel %vm179, nan, %v189
    %191 = vst [vmem:[#allocation7] sm:$0xf] %v190
    // Predicated region
    $region18: #{tpu_custom_call.1} parent=1 // pred_check
      _
    $region19: #{tpu_custom_call.1} parent=1 // pred_check_branch
      %193 = sbr.rel (0) target = $region21
    $region20: #{tpu_custom_call.1} parent=1 // pred_region
      %s195 = ssub.s32 64, 64
      %196 = vsyncadd [#allocation4], %s195
      %s198 = sshll.u32 [#allocation7], 4
      %s199 = int_to_ptr.vmem [resolvable:$true] %s198
      %201 = dma.vmem_to_hbm [thread:$0]  %s199, 64, %s2, [#allocation4]
    $region21: #{tpu_custom_call.1} parent=1 // pred_fallthru
      _
    // Predicated region
    $region22: #{tpu_custom_call.1} parent=1 // pred_check
      _
    $region23: #{tpu_custom_call.1} parent=1 // pred_check_branch
      %203 = sbr.rel (0) target = $region25
    $region24: #{tpu_custom_call.1} parent=1 // pred_region
      %204 = dma.done [#allocation4], 64
    $region25: #{tpu_custom_call.1} parent=1 // pred_fallthru
      _
    %205 = vsyncpa [#allocation3], 1
    %206 = vsyncpa [#allocation6], 1
    %207 = vsyncpa [#allocation4], 1

</llo_original>
